<compile_context>
chip_gen: v7x
topology: tpu7x:2x2x1
jax: 0.10.0
libtpu: 0.0.40
codegen_flags: <defaults>
</compile_context>

<pallas_src>
import functools
import math

import jax
import jax.numpy as jnp
from jax.experimental import pallas as pl
from jax.experimental.pallas import tpu as pltpu

_LANE = 128
_VMEM_LIMIT_BYTES = 48 * 1024 * 1024  # headroom on v7x (64 MiB), fine on v5e/v6e


def _round_up(v, m):
    return ((v + m - 1) // m) * m


# ---------------------------------------------------------------------------
# Fast path: whole 2-layer GCN in one kernel (everything VMEM-resident).
# Used when N <= 128 and the feature widths are small (the demo case).
# Full-array blocks bypass the (8,128) divisibility rule, so no 128-padding.
# ---------------------------------------------------------------------------
def _fused_small_kernel(x_ref, adj_ref, w1_ref, b1_ref, w2_ref, b2_ref, o_ref):
    adj = adj_ref[...]
    s1 = jnp.dot(x_ref[...], w1_ref[...], preferred_element_type=jnp.float32)
    h = jnp.maximum(
        jnp.dot(adj, s1, preferred_element_type=jnp.float32) + b1_ref[...], 0.0)
    s2 = jnp.dot(h, w2_ref[...], preferred_element_type=jnp.float32)
    y = jnp.dot(adj, s2, preferred_element_type=jnp.float32) + b2_ref[...]
    o_ref[...] = y.astype(o_ref.dtype)


def _gcn_forward_small(x, adj, w1, b1, w2, b2):
    batch, n, nfeat = x.shape
    nhid = w1.shape[1]
    nout = w2.shape[1]
    n_pad = max(_round_up(n, 8), 8)

    if n_pad != n:
        x = jnp.zeros((batch, n_pad, nfeat), jnp.float32).at[:, :n, :].set(x)
        adj = jnp.zeros((batch, n_pad, n_pad), jnp.float32).at[:, :n, :n].set(adj)
    b1r = b1.reshape(1, nhid)
    b2r = b2.reshape(1, nout)

    out = pl.pallas_call(
        _fused_small_kernel,
        out_shape=jax.ShapeDtypeStruct((batch, n_pad, nout), jnp.float32),
        grid_spec=pltpu.PrefetchScalarGridSpec(
            num_scalar_prefetch=0,
            grid=(batch,),
            in_specs=[
                pl.BlockSpec((pl.Squeezed(), n_pad, nfeat), lambda b: (b, 0, 0)),
                pl.BlockSpec((pl.Squeezed(), n_pad, n_pad), lambda b: (b, 0, 0)),
                pl.BlockSpec((nfeat, nhid), lambda b: (0, 0)),
                pl.BlockSpec((1, nhid), lambda b: (0, 0)),
                pl.BlockSpec((nhid, nout), lambda b: (0, 0)),
                pl.BlockSpec((1, nout), lambda b: (0, 0)),
            ],
            out_specs=pl.BlockSpec((pl.Squeezed(), n_pad, nout),
                                   lambda b: (b, 0, 0)),
        ),
        compiler_params=pltpu.CompilerParams(
            dimension_semantics=("parallel",),
            vmem_limit_bytes=_VMEM_LIMIT_BYTES,
        ),
    )(x, adj, w1, b1r, w2, b2r)
    return out[:, :n, :]


# ---------------------------------------------------------------------------
# General path, kernel 1: adj aggregation with fused feature-transform epilogue.
#   grid = (B, N_pad/tm, N_pad/tk)   (k innermost / "arbitrary")
#   adj streamed as (tm, tk) tiles; S resident per batch (sliced with pl.ds);
#   f32 accumulator scratch; epilogue: [acc @ W] + b, relu, store.
# ---------------------------------------------------------------------------
def _adj_layer_kernel(*refs, apply_relu, fuse_w, tk):
    if fuse_w:
        adj_ref, s_ref, w_ref, b_ref, o_ref, acc_ref = refs
    else:
        adj_ref, s_ref, b_ref, o_ref, acc_ref = refs
        w_ref = None

    k = pl.program_id(2)

    @pl.when(k == 0)
    def _():
        acc_ref[...] = jnp.zeros_like(acc_ref)

    start = pl.multiple_of(k * tk, tk)
    s_blk = s_ref[pl.ds(start, tk), :]               # slice of resident S
    acc_ref[...] += jnp.dot(adj_ref[...], s_blk,
                            preferred_element_type=jnp.float32)

    @pl.when(k == pl.num_programs(2) - 1)
    def _():
        y = acc_ref[...]
        if fuse_w:
            # Small f32 matmul in the epilogue (W kept f32 for accuracy).
            y = jnp.dot(y, w_ref[...], preferred_element_type=jnp.float32)
        y = y + b_ref[...]
        if apply_relu:
            y = jnp.maximum(y, 0.0)
        o_ref[...] = y.astype(o_ref.dtype)


def _adj_layer(adj, s, w, b2d, *, apply_relu, fuse_w, tm, tk, out_dtype):
    batch, n_pad, _ = adj.shape
    f_s = s.shape[-1]
    f_out = w.shape[1] if fuse_w else f_s

    kern = functools.partial(_adj_layer_kernel, apply_relu=apply_relu,
                             fuse_w=fuse_w, tk=tk)

    in_specs = [
        # adj tile streamed per grid step.
        pl.BlockSpec((pl.Squeezed(), tm, tk), lambda b, i, k: (b, i, k)),
        # S resident per batch: block index constant across (i, k) -> DMA'd once
        # per batch.  TODO(synk): for very large N_pad, fall back to k-streamed
        # S tiles so the resident buffer does not pressure v7x's 64 MiB VMEM.
        pl.BlockSpec((pl.Squeezed(), n_pad, f_s), lambda b, i, k: (b, 0, 0)),
    ]
    inputs = [adj, s]
    if fuse_w:
        in_specs.append(pl.BlockSpec((f_s, f_out), lambda b, i, k: (0, 0)))
        inputs.append(w)
    in_specs.append(pl.BlockSpec((1, f_out), lambda b, i, k: (0, 0)))
    inputs.append(b2d)

    flops = 2 * batch * n_pad * n_pad * f_s
    if fuse_w:
        flops += 2 * batch * n_pad * f_s * f_out
    bytes_accessed = int(
        adj.size * adj.dtype.itemsize + s.size * s.dtype.itemsize
        + (w.size * 4 if fuse_w else 0) + b2d.size * 4
        + batch * n_pad * f_out * jnp.dtype(out_dtype).itemsize)

    return pl.pallas_call(
        kern,
        out_shape=jax.ShapeDtypeStruct((batch, n_pad, f_out), out_dtype),
        grid_spec=pltpu.PrefetchScalarGridSpec(
            num_scalar_prefetch=0,
            grid=(batch, n_pad // tm, n_pad // tk),
            in_specs=in_specs,
            out_specs=pl.BlockSpec((pl.Squeezed(), tm, f_out),
                                   lambda b, i, k: (b, i, 0)),
            scratch_shapes=[pltpu.VMEM((tm, f_s), jnp.float32)],
        ),
        compiler_params=pltpu.CompilerParams(
            dimension_semantics=("parallel", "parallel", "arbitrary"),
            vmem_limit_bytes=_VMEM_LIMIT_BYTES,
        ),
        cost_estimate=pl.CostEstimate(flops=flops, transcendentals=0,
                                      bytes_accessed=bytes_accessed),
    )(*inputs)


# ---------------------------------------------------------------------------
# General path, kernel 2: row-tiled feature transform  S = X @ W
# (only used when aggregate_first=False; bias/relu live in the adj epilogue).
# ---------------------------------------------------------------------------
def _feat_kernel(x_ref, w_ref, o_ref):
    x = x_ref[...]
    w = w_ref[...].astype(x.dtype)
    o_ref[...] = jnp.dot(x, w, preferred_element_type=jnp.float32).astype(o_ref.dtype)


def _feature_transform(x2d, w, *, out_dtype):
    rows, f_in = x2d.shape
    f_out = w.shape[1]
    tr = 512 if rows % 512 == 0 else (256 if rows % 256 == 0 else 128)
    # TODO(synk): tile W over f_out if f_in_p * f_out_p * 4B (x2 buffers)
    # approaches the VMEM budget (not needed for GCN-sized layers).
    return pl.pallas_call(
        _feat_kernel,
        out_shape=jax.ShapeDtypeStruct((rows, f_out), out_dtype),
        grid_spec=pltpu.PrefetchScalarGridSpec(
            num_scalar_prefetch=0,
            grid=(rows // tr,),
            in_specs=[
                pl.BlockSpec((tr, f_in), lambda r: (r, 0)),
                pl.BlockSpec((f_in, f_out), lambda r: (0, 0)),
            ],
            out_specs=pl.BlockSpec((tr, f_out), lambda r: (r, 0)),
        ),
        compiler_params=pltpu.CompilerParams(
            dimension_semantics=("parallel",),
            vmem_limit_bytes=_VMEM_LIMIT_BYTES,
        ),
        cost_estimate=pl.CostEstimate(
            flops=2 * rows * f_in * f_out, transcendentals=0,
            bytes_accessed=int(x2d.size * x2d.dtype.itemsize + w.size * 4
                               + rows * f_out * jnp.dtype(out_dtype).itemsize)),
    )(x2d, w)


# ---------------------------------------------------------------------------
# One GraphConvolution layer on padded operands.
# ---------------------------------------------------------------------------
def _gcn_layer(x, adj, w, b2d, *, apply_relu, aggregate_first, tm, tk, out_dtype):
    batch, n_pad, f_in = x.shape
    f_out = w.shape[1]
    if aggregate_first:
        # act( (adj @ x) @ W + b ) -- single fused kernel, streams the narrower
        # width through the O(N^2) matmul, no HBM intermediate.
        return _adj_layer(adj, x, w, b2d, apply_relu=apply_relu, fuse_w=True,
                          tm=tm, tk=tk, out_dtype=out_dtype)
    # act( adj @ (x @ W) + b ) -- transform first (when f_in_p > f_out_p), then
    # aggregate; bias/relu fused into the aggregation epilogue.
    sup = _feature_transform(x.reshape(batch * n_pad, f_in), w,
                             out_dtype=x.dtype).reshape(batch, n_pad, f_out)
    return _adj_layer(adj, sup, None, b2d, apply_relu=apply_relu, fuse_w=False,
                      tm=tm, tk=tk, out_dtype=out_dtype)


def gcn_forward(x, adj, w1, b1, w2, b2, *, compute_dtype=jnp.bfloat16,
                force_general=False):
    """2-layer GCN forward with Pallas TPU kernels.

    x: (B, N, nfeat) f32   adj: (B, N, N) f32
    w1: (nfeat, nhid) b1: (nhid,)   w2: (nhid, nout) b2: (nout,)
    compute_dtype: dtype adj / x / intermediate travel over HBM with in the
      general path (default bf16; accumulation + epilogue stay f32).  The small
      fast path always runs f32 (everything is VMEM-resident anyway).
    returns (B, N, nout) f32
    """
    batch, n, nfeat = x.shape
    nhid = w1.shape[1]
    nout = w2.shape[1]

    # --- Small-problem fast path: one fused kernel, N padded only to 8. ---
    if (not force_general) and n <= 128 and max(nfeat, nhid, nout) <= 512:
        return _gcn_forward_small(x, adj, w1, b1, w2, b2)

    # --- General tiled path. ---
    f_in_p = _round_up(nfeat, _LANE)
    f_hid_p = _round_up(nhid, _LANE)
    f_out_p = _round_up(nout, _LANE)

    n_pad = max(_round_up(n, _LANE), _LANE)
    # Tiles capped at 256 so the footprint also fits v7x's 64 MiB VMEM; on
    # v5e/v6e (128 MiB) 256 tiles with per-batch-resident S are already
    # comfortably past the small-tile overhead regime.
    tm = tk = 256 if n_pad % 256 == 0 else 128

    cdt = compute_dtype
    xp = jnp.zeros((batch, n_pad, f_in_p), cdt).at[:, :n, :nfeat].set(
        x.astype(cdt))
    adjp = jnp.zeros((batch, n_pad, n_pad), cdt).at[:, :n, :n].set(
        adj.astype(cdt))
    w1p = jnp.zeros((f_in_p, f_hid_p), jnp.float32).at[:nfeat, :nhid].set(w1)
    b1p = jnp.zeros((1, f_hid_p), jnp.float32).at[0, :nhid].set(b1)
    w2p = jnp.zeros((f_hid_p, f_out_p), jnp.float32).at[:nhid, :nout].set(w2)
    b2p = jnp.zeros((1, f_out_p), jnp.float32).at[0, :nout].set(b2)

    # Contraction-order decision from PADDED widths (ties -> fused order).
    h = _gcn_layer(xp, adjp, w1p, b1p, apply_relu=True,
                   aggregate_first=(f_in_p <= f_hid_p), tm=tm, tk=tk,
                   out_dtype=cdt)
    y = _gcn_layer(h, adjp, w2p, b2p, apply_relu=False,
                   aggregate_first=(f_hid_p <= f_out_p), tm=tm, tk=tk,
                   out_dtype=jnp.float32)
    return y[:, :n, :nout]


# ---------------------------------------------------------------------------
# Reference + init helpers.
# ---------------------------------------------------------------------------
def init_gcn_params(key, nfeat, nhid, nout):
    """uniform(-stdv, stdv) with stdv = 1/sqrt(out_features), as in the module."""
    k1, k2, k3, k4 = jax.random.split(key, 4)
    stdv1 = 1.0 / math.sqrt(nhid)
    stdv2 = 1.0 / math.sqrt(nout)
    w1 = jax.random.uniform(k1, (nfeat, nhid), jnp.float32, -stdv1, stdv1)
    b1 = jax.random.uniform(k2, (nhid,), jnp.float32, -stdv1, stdv1)
    w2 = jax.random.uniform(k3, (nhid, nout), jnp.float32, -stdv2, stdv2)
    b2 = jax.random.uniform(k4, (nout,), jnp.float32, -stdv2, stdv2)
    return w1, b1, w2, b2


def gcn_reference(x, adj, w1, b1, w2, b2):
    h = jnp.maximum(jnp.matmul(adj, jnp.matmul(x, w1)) + b1, 0.0)
    return jnp.matmul(adj, jnp.matmul(h, w2)) + b2


def _make_inputs(kx, ka, batch, n, nfeat):
    x = jax.random.normal(kx, (batch, n, nfeat), jnp.float32)
    a = jax.random.uniform(ka, (batch, n, n), jnp.float32)
    adj = (a + jnp.swapaxes(a, 1, 2)) * 0.5 + jnp.eye(n, dtype=jnp.float32)
    adj = adj / jnp.sum(adj, axis=-1, keepdims=True)
    return x, adj


if __name__ == "__main__":
    key = jax.random.PRNGKey(0)
    k_x, k_adj, k_params, k_x2, k_adj2 = jax.random.split(key, 5)

    # Shapes consistent with the module: B=2 graphs, N=8 nodes,
    # nfeat=16, nhid=32, output_dim=16.
    B, N, nfeat, nhid, nout = 2, 8, 16, 32, 16
    w1, b1, w2, b2 = init_gcn_params(k_params, nfeat, nhid, nout)

    # --- Test 1: small fused fast path (single pallas_call, f32). ---
    x, adj = _make_inputs(k_x, k_adj, B, N, nfeat)
    out = jax.block_until_ready(gcn_forward(x, adj, w1, b1, w2, b2))
    ref = gcn_reference(x, adj, w1, b1, w2, b2)
    assert out.shape == (B, N, nout), out.shape
    assert jnp.allclose(out, ref, atol=1e-4, rtol=1e-4), \
        float(jnp.max(jnp.abs(out - ref)))

    # --- Test 2: general tiled path (bf16 DMA, resident S, fused epilogue). ---
    N2 = 300  # pads to 384 -> 128 tiles, 3 k-steps per row tile
    x2, adj2 = _make_inputs(k_x2, k_adj2, B, N2, nfeat)
    out2 = jax.block_until_ready(
        gcn_forward(x2, adj2, w1, b1, w2, b2, force_general=True))
    ref2 = gcn_reference(x2, adj2, w1, b1, w2, b2)
    assert out2.shape == (B, N2, nout), out2.shape
    # bf16 inputs over HBM (f32 accumulation) -> relaxed tolerance.
    assert jnp.allclose(out2, ref2, atol=5e-2, rtol=5e-2), \
        float(jnp.max(jnp.abs(out2 - ref2)))

    print("KERNEL_OK")
</pallas_src>

<mosaic_0001>
module attributes {stable_mosaic.version = 11 : i64} {
  func.func @_fused_small_kernel(%arg0: i32, %arg1: memref<1x8x16xf32, #tpu.memory_space<vmem>>, %arg2: memref<1x8x8xf32, #tpu.memory_space<vmem>>, %arg3: memref<16x32xf32, #tpu.memory_space<vmem>>, %arg4: memref<1x32xf32, #tpu.memory_space<vmem>>, %arg5: memref<32x16xf32, #tpu.memory_space<vmem>>, %arg6: memref<1x16xf32, #tpu.memory_space<vmem>>, %arg7: memref<1x8x16xf32, #tpu.memory_space<vmem>>) attributes {dimension_semantics = [#tpu.dimension_semantics<parallel>], iteration_bounds = array<i64: 2>, scalar_prefetch = 0 : i64, scratch_operands = 0 : i64, tpu.core_type = #tpu.core_type<tc>, window_params = [{transform_indices = @transform_0, window_bounds = array<i64: 1, 8, 16>}, {transform_indices = @transform_1, window_bounds = array<i64: 1, 8, 8>}, {pipeline_mode = #tpu.pipeline_mode<synchronous>, transform_indices = @transform_2, window_bounds = array<i64: 16, 32>}, {pipeline_mode = #tpu.pipeline_mode<synchronous>, transform_indices = @transform_3, window_bounds = array<i64: 1, 32>}, {pipeline_mode = #tpu.pipeline_mode<synchronous>, transform_indices = @transform_4, window_bounds = array<i64: 32, 16>}, {pipeline_mode = #tpu.pipeline_mode<synchronous>, transform_indices = @transform_5, window_bounds = array<i64: 1, 16>}, {transform_indices = @transform_6, window_bounds = array<i64: 1, 8, 16>}]} {
    %c0 = arith.constant 0 : index
    %c0_0 = arith.constant 0 : index
    %c0_1 = arith.constant 0 : index
    %0 = vector.load %arg2[%c0, %c0_0, %c0_1] : memref<1x8x8xf32, #tpu.memory_space<vmem>>, vector<1x8x8xf32>
    %1 = vector.shape_cast %0 : vector<1x8x8xf32> to vector<8x8xf32>
    %c0_2 = arith.constant 0 : index
    %c0_3 = arith.constant 0 : index
    %c0_4 = arith.constant 0 : index
    %2 = vector.load %arg1[%c0_2, %c0_3, %c0_4] : memref<1x8x16xf32, #tpu.memory_space<vmem>>, vector<1x8x16xf32>
    %3 = vector.shape_cast %2 : vector<1x8x16xf32> to vector<8x16xf32>
    %c0_5 = arith.constant 0 : index
    %c0_6 = arith.constant 0 : index
    %4 = vector.load %arg3[%c0_5, %c0_6] : memref<16x32xf32, #tpu.memory_space<vmem>>, vector<16x32xf32>
    %cst = arith.constant dense<0.000000e+00> : vector<8x32xf32>
    %5 = tpu.matmul %3, %4, %cst {dimension_numbers = #tpu.dot_dimension_numbers<[1], [0], [0], [1], [0, 0, 1, 1], [], []>} : vector<8x16xf32>, vector<16x32xf32>, vector<8x32xf32> -> vector<8x32xf32>
    %cst_7 = arith.constant dense<0.000000e+00> : vector<8x32xf32>
    %6 = tpu.matmul %1, %5, %cst_7 {dimension_numbers = #tpu.dot_dimension_numbers<[1], [0], [0], [1], [0, 0, 1, 1], [], []>} : vector<8x8xf32>, vector<8x32xf32>, vector<8x32xf32> -> vector<8x32xf32>
    %c0_8 = arith.constant 0 : index
    %c0_9 = arith.constant 0 : index
    %7 = vector.load %arg4[%c0_8, %c0_9] : memref<1x32xf32, #tpu.memory_space<vmem>>, vector<1x32xf32>
    %8 = vector.broadcast %7 : vector<1x32xf32> to vector<8x32xf32>
    %9 = arith.addf %6, %8 : vector<8x32xf32>
    %cst_10 = arith.constant 0.000000e+00 : f32
    %10 = vector.broadcast %cst_10 : f32 to vector<8x32xf32>
    %11 = arith.maximumf %9, %10 : vector<8x32xf32>
    %c0_11 = arith.constant 0 : index
    %c0_12 = arith.constant 0 : index
    %12 = vector.load %arg5[%c0_11, %c0_12] : memref<32x16xf32, #tpu.memory_space<vmem>>, vector<32x16xf32>
    %cst_13 = arith.constant dense<0.000000e+00> : vector<8x16xf32>
    %13 = tpu.matmul %11, %12, %cst_13 {dimension_numbers = #tpu.dot_dimension_numbers<[1], [0], [0], [1], [0, 0, 1, 1], [], []>} : vector<8x32xf32>, vector<32x16xf32>, vector<8x16xf32> -> vector<8x16xf32>
    %cst_14 = arith.constant dense<0.000000e+00> : vector<8x16xf32>
    %14 = tpu.matmul %1, %13, %cst_14 {dimension_numbers = #tpu.dot_dimension_numbers<[1], [0], [0], [1], [0, 0, 1, 1], [], []>} : vector<8x8xf32>, vector<8x16xf32>, vector<8x16xf32> -> vector<8x16xf32>
    %c0_15 = arith.constant 0 : index
    %c0_16 = arith.constant 0 : index
    %15 = vector.load %arg6[%c0_15, %c0_16] : memref<1x16xf32, #tpu.memory_space<vmem>>, vector<1x16xf32>
    %16 = vector.broadcast %15 : vector<1x16xf32> to vector<8x16xf32>
    %17 = arith.addf %14, %16 : vector<8x16xf32>
    %c0_17 = arith.constant 0 : index
    %c0_18 = arith.constant 0 : index
    %c0_19 = arith.constant 0 : index
    %18 = vector.load %arg7[%c0_17, %c0_18, %c0_19] : memref<1x8x16xf32, #tpu.memory_space<vmem>>, vector<1x8x16xf32>
    %19 = vector.shape_cast %18 : vector<1x8x16xf32> to vector<8x16xf32>
    %20 = vector.shape_cast %17 : vector<8x16xf32> to vector<1x8x16xf32>
    tpu.vector_store %arg7[%c0_17, %c0_18, %c0_19], %20 {strides = array<i32>} : memref<1x8x16xf32, #tpu.memory_space<vmem>>, vector<1x8x16xf32>,
    return
  }
  func.func @transform_0(%arg0: i32) -> (i32, i32, i32) {
    %c0_i32 = arith.constant 0 : i32
    %c0_i32_0 = arith.constant 0 : i32
    %c0_i32_1 = arith.constant 0 : i32
    return %arg0, %c0_i32, %c0_i32_0 : i32, i32, i32
  }
  func.func @transform_1(%arg0: i32) -> (i32, i32, i32) {
    %c0_i32 = arith.constant 0 : i32
    %c0_i32_0 = arith.constant 0 : i32
    %c0_i32_1 = arith.constant 0 : i32
    return %arg0, %c0_i32, %c0_i32_0 : i32, i32, i32
  }
  func.func @transform_2(%arg0: i32) -> (i32, i32) {
    %c0_i32 = arith.constant 0 : i32
    %c0_i32_0 = arith.constant 0 : i32
    %c0_i32_1 = arith.constant 0 : i32
    return %c0_i32, %c0_i32_0 : i32, i32
  }
  func.func @transform_3(%arg0: i32) -> (i32, i32) {
    %c0_i32 = arith.constant 0 : i32
    %c0_i32_0 = arith.constant 0 : i32
    %c0_i32_1 = arith.constant 0 : i32
    return %c0_i32, %c0_i32_0 : i32, i32
  }
  func.func @transform_4(%arg0: i32) -> (i32, i32) {
    %c0_i32 = arith.constant 0 : i32
    %c0_i32_0 = arith.constant 0 : i32
    %c0_i32_1 = arith.constant 0 : i32
    return %c0_i32, %c0_i32_0 : i32, i32
  }
  func.func @transform_5(%arg0: i32) -> (i32, i32) {
    %c0_i32 = arith.constant 0 : i32
    %c0_i32_0 = arith.constant 0 : i32
    %c0_i32_1 = arith.constant 0 : i32
    return %c0_i32, %c0_i32_0 : i32, i32
  }
  func.func @transform_6(%arg0: i32) -> (i32, i32, i32) {
    %c0_i32 = arith.constant 0 : i32
    %c0_i32_0 = arith.constant 0 : i32
    %c0_i32_1 = arith.constant 0 : i32
    return %arg0, %c0_i32, %c0_i32_0 : i32, i32, i32
  }
}

</mosaic_0001>

<llo_original>
// kernel: tpu_custom_call.1
$region0: #{tpu_custom_call.1}
  #allocation0 [shape = 'u32[]', space=smem, size = 0x4, offset = 0x4, fixed_abs, tag = 'smem constant byte address 0x4 - core index']
  #allocation1 [shape = 'u32[144,128]{1,0:T(1,128)}', space=vmem, size = 0x12000, scoped, tag = 'internal scratch']
  %s0 = inlined_call_operand.vmem [shape: f32[2,8,16], index: 0, kind: input, shape index: {}]
  %s1 = inlined_call_operand.vmem [shape: f32[2,8,8], index: 1, kind: input, shape index: {}]
  %s2 = inlined_call_operand.vmem [shape: f32[16,32], index: 2, kind: input, shape index: {}]
  %s3 = inlined_call_operand.vmem [shape: f32[1,32], index: 3, kind: input, shape index: {}]
  %s4 = inlined_call_operand.vmem [shape: f32[32,16], index: 4, kind: input, shape index: {}]
  %s5 = inlined_call_operand.vmem [shape: f32[1,16], index: 5, kind: input, shape index: {}]
  %s6 = inlined_call_operand.hbm [shape: f32[2,8,16], index: 6, kind: output, shape index: {}]
  %s7 = sld [smem:[#allocation0]]
  $region57: #{tpu_custom_call.1} parent=0
    _
  %s9 = ssub.s32 1, %s7
  %s10 = scalar_select 0, %s9, %s7
  $region1: #{tpu_custom_call.1} parent=0
    #allocation2 [shape = 'u8[8192]{0}', space=vmem, size = 0x2000, scoped, tag = 'output window, operand 0']
    #allocation3 [shape = 's32[2]{0}', space=sflag, size = 0x8, scoped, tag = 'scoped memory for tpu_custom_call.1']
    %11 = vsyncpa [#allocation3], 0
    %s12 = scalar_lea.sflag [#allocation3], 1
    %13 = vsyncpa %s12, 0
    loop: start=0, step=1, limit=4
    $region2: #{tpu_custom_call.1} parent=1 // loop_pre_header
      _
    $region3: #{tpu_custom_call.1} parent=1 // loop_header
      %s15 = sphi 0, %s19
      %p16 = scmp.ge.s32.totalorder %s15, 4
      %s25 = sphi 0, %s27
      %s28 = sphi 0, %s25
      %s29 = sphi 0, %s28
      %s45 = sphi 0, %s29
      %s51 = sphi 0, %s53
      %s54 = sphi 0, %s51
      %s55 = sphi 0, %s54
      %s71 = sphi 0, %s55
      %s75 = sphi 0, %s75
      %s77 = sphi 0, %s75
      %s78 = sphi 0, %s77
      %s92 = sphi 0, %s78
      %s96 = sphi 0, %s96
      %s98 = sphi 0, %s96
      %s99 = sphi 0, %s98
      %s113 = sphi 0, %s99
      %s117 = sphi 0, %s117
      %s119 = sphi 0, %s117
      %s120 = sphi 0, %s119
      %s134 = sphi 0, %s120
      %s138 = sphi 0, %s138
      %s140 = sphi 0, %s138
      %s141 = sphi 0, %s140
      %s155 = sphi 0, %s141
      %s161 = sphi 0, %s163
      %s164 = sphi 0, %s161
      %s165 = sphi 0, %s164
      %s181 = sphi 0, %s165
    $region4: #{tpu_custom_call.1} parent=1 // loop_header_branch
      %18 = sbr.rel (%p16) target = $region8
    $region5: #{tpu_custom_call.1} parent=1 // loop_body
      %s20 = ssub.s32 %s15, 1
      %s21 = ssub.s32 %s15, 2
      %s22 = sadd.s32 %s15, 1
      %s23 = ssub.s32 %s15, %s22
      %p24 = scmp.eq.s32.totalorder %s23, 0
      %s26 = sadd.s32 %s25, 1
      %s27 = scalar_select %p24, %s25, %s26
      %p30 = pneg %p24
      %p31 = scmp.eq.s32.totalorder %s15, 1
      %p32 = por %p30, %p31
      %p33 = scmp.ne.s32.totalorder %s25, %s28
      %p34 = scmp.eq.s32.totalorder %s15, 0
      %p35 = por %p33, %p34
      %p36 = scmp.ne.s32.totalorder %s25, %s28
      %p37 = scmp.eq.s32.totalorder %s20, 1
      %p38 = por %p36, %p37
      %p39 = scmp.ne.s32.totalorder %s28, %s29
      %p40 = scmp.eq.s32.totalorder %s20, 0
      %p41 = por %p39, %p40
      %p42 = scmp.ne.s32.totalorder %s28, %s29
      %p43 = scmp.eq.s32.totalorder %s21, 1
      %p44 = por %p42, %p43
      %p46 = scmp.ne.s32.totalorder %s29, %s45
      %p47 = scmp.eq.s32.totalorder %s21, 0
      %p48 = por %p46, %p47
      %s49 = ssub.s32 %s15, %s22
      %p50 = scmp.eq.s32.totalorder %s49, 0
      %s52 = sadd.s32 %s51, 1
      %s53 = scalar_select %p50, %s51, %s52
      %p56 = pneg %p50
      %p57 = scmp.eq.s32.totalorder %s15, 1
      %p58 = por %p56, %p57
      %p59 = scmp.ne.s32.totalorder %s51, %s54
      %p60 = scmp.eq.s32.totalorder %s15, 0
      %p61 = por %p59, %p60
      %p62 = scmp.ne.s32.totalorder %s51, %s54
      %p63 = scmp.eq.s32.totalorder %s20, 1
      %p64 = por %p62, %p63
      %p65 = scmp.ne.s32.totalorder %s54, %s55
      %p66 = scmp.eq.s32.totalorder %s20, 0
      %p67 = por %p65, %p66
      %p68 = scmp.ne.s32.totalorder %s54, %s55
      %p69 = scmp.eq.s32.totalorder %s21, 1
      %p70 = por %p68, %p69
      %p72 = scmp.ne.s32.totalorder %s55, %s71
      %p73 = scmp.eq.s32.totalorder %s21, 0
      %p74 = por %p72, %p73
      %s76 = sadd.s32 %s75, 1
      %p79 = scmp.eq.s32.totalorder %s15, 1
      %p80 = scmp.ne.s32.totalorder %s75, %s77
      %p81 = scmp.eq.s32.totalorder %s15, 0
      %p82 = por %p80, %p81
      %p83 = scmp.ne.s32.totalorder %s75, %s77
      %p84 = scmp.eq.s32.totalorder %s20, 1
      %p85 = por %p83, %p84
      %p86 = scmp.ne.s32.totalorder %s77, %s78
      %p87 = scmp.eq.s32.totalorder %s20, 0
      %p88 = por %p86, %p87
      %p89 = scmp.ne.s32.totalorder %s77, %s78
      %p90 = scmp.eq.s32.totalorder %s21, 1
      %p91 = por %p89, %p90
      %p93 = scmp.ne.s32.totalorder %s78, %s92
      %p94 = scmp.eq.s32.totalorder %s21, 0
      %p95 = por %p93, %p94
      %s97 = sadd.s32 %s96, 1
      %p100 = scmp.eq.s32.totalorder %s15, 1
      %p101 = scmp.ne.s32.totalorder %s96, %s98
      %p102 = scmp.eq.s32.totalorder %s15, 0
      %p103 = por %p101, %p102
      %p104 = scmp.ne.s32.totalorder %s96, %s98
      %p105 = scmp.eq.s32.totalorder %s20, 1
      %p106 = por %p104, %p105
      %p107 = scmp.ne.s32.totalorder %s98, %s99
      %p108 = scmp.eq.s32.totalorder %s20, 0
      %p109 = por %p107, %p108
      %p110 = scmp.ne.s32.totalorder %s98, %s99
      %p111 = scmp.eq.s32.totalorder %s21, 1
      %p112 = por %p110, %p111
      %p114 = scmp.ne.s32.totalorder %s99, %s113
      %p115 = scmp.eq.s32.totalorder %s21, 0
      %p116 = por %p114, %p115
      %s118 = sadd.s32 %s117, 1
      %p121 = scmp.eq.s32.totalorder %s15, 1
      %p122 = scmp.ne.s32.totalorder %s117, %s119
      %p123 = scmp.eq.s32.totalorder %s15, 0
      %p124 = por %p122, %p123
      %p125 = scmp.ne.s32.totalorder %s117, %s119
      %p126 = scmp.eq.s32.totalorder %s20, 1
      %p127 = por %p125, %p126
      %p128 = scmp.ne.s32.totalorder %s119, %s120
      %p129 = scmp.eq.s32.totalorder %s20, 0
      %p130 = por %p128, %p129
      %p131 = scmp.ne.s32.totalorder %s119, %s120
      %p132 = scmp.eq.s32.totalorder %s21, 1
      %p133 = por %p131, %p132
      %p135 = scmp.ne.s32.totalorder %s120, %s134
      %p136 = scmp.eq.s32.totalorder %s21, 0
      %p137 = por %p135, %p136
      %s139 = sadd.s32 %s138, 1
      %p142 = scmp.eq.s32.totalorder %s15, 1
      %p143 = scmp.ne.s32.totalorder %s138, %s140
      %p144 = scmp.eq.s32.totalorder %s15, 0
      %p145 = por %p143, %p144
      %p146 = scmp.ne.s32.totalorder %s138, %s140
      %p147 = scmp.eq.s32.totalorder %s20, 1
      %p148 = por %p146, %p147
      %p149 = scmp.ne.s32.totalorder %s140, %s141
      %p150 = scmp.eq.s32.totalorder %s20, 0
      %p151 = por %p149, %p150
      %p152 = scmp.ne.s32.totalorder %s140, %s141
      %p153 = scmp.eq.s32.totalorder %s21, 1
      %p154 = por %p152, %p153
      %p156 = scmp.ne.s32.totalorder %s141, %s155
      %p157 = scmp.eq.s32.totalorder %s21, 0
      %p158 = por %p156, %p157
      %s159 = ssub.s32 %s15, %s22
      %p160 = scmp.eq.s32.totalorder %s159, 0
      %s162 = sadd.s32 %s161, 1
      %s163 = scalar_select %p160, %s161, %s162
      %p166 = pneg %p160
      %p167 = scmp.eq.s32.totalorder %s15, 1
      %p168 = por %p166, %p167
      %p169 = scmp.ne.s32.totalorder %s161, %s164
      %p170 = scmp.eq.s32.totalorder %s15, 0
      %p171 = por %p169, %p170
      %p172 = scmp.ne.s32.totalorder %s161, %s164
      %p173 = scmp.eq.s32.totalorder %s20, 1
      %p174 = por %p172, %p173
      %p175 = scmp.ne.s32.totalorder %s164, %s165
      %p176 = scmp.eq.s32.totalorder %s20, 0
      %p177 = por %p175, %p176
      %p178 = scmp.ne.s32.totalorder %s164, %s165
      %p179 = scmp.eq.s32.totalorder %s21, 1
      %p180 = por %p178, %p179
      %p182 = scmp.ne.s32.totalorder %s165, %s181
      %p183 = scmp.eq.s32.totalorder %s21, 0
      %p184 = por %p182, %p183
      %p185 = scmp.le.s32.totalorder 1, %s15
      %p186 = scmp.lt.s32.totalorder %s15, 3
      %p187 = pnand %p185, %p186
      %p188 = pneg %p187
      // Predicated region
      $region9: #{tpu_custom_call.1} parent=5 // pred_check
        _
      $region10: #{tpu_custom_call.1} parent=5 // pred_check_branch
        %190 = sbr.rel (%p187) target = $region12
      $region11: #{tpu_custom_call.1} parent=5 // pred_region
        %s191 = ssub.s32 %s15, 1
        // Predicated region
        $region13: #{tpu_custom_call.1} parent=11 // pred_check
          %p192 = pneg %p88
        $region14: #{tpu_custom_call.1} parent=11 // pred_check_branch
          %194 = sbr.rel (%p192) target = $region16
        $region15: #{tpu_custom_call.1} parent=11 // pred_region
          _
        $region16: #{tpu_custom_call.1} parent=11 // pred_fallthru
          _
        // Predicated region
        $region17: #{tpu_custom_call.1} parent=11 // pred_check
          %p195 = pneg %p109
        $region18: #{tpu_custom_call.1} parent=11 // pred_check_branch
          %197 = sbr.rel (%p195) target = $region20
        $region19: #{tpu_custom_call.1} parent=11 // pred_region
          _
        $region20: #{tpu_custom_call.1} parent=11 // pred_fallthru
          _
        // Predicated region
        $region21: #{tpu_custom_call.1} parent=11 // pred_check
          %p198 = pneg %p130
        $region22: #{tpu_custom_call.1} parent=11 // pred_check_branch
          %200 = sbr.rel (%p198) target = $region24
        $region23: #{tpu_custom_call.1} parent=11 // pred_region
          _
        $region24: #{tpu_custom_call.1} parent=11 // pred_fallthru
          _
        // Predicated region
        $region25: #{tpu_custom_call.1} parent=11 // pred_check
          %p201 = pneg %p151
        $region26: #{tpu_custom_call.1} parent=11 // pred_check_branch
          %203 = sbr.rel (%p201) target = $region28
        $region27: #{tpu_custom_call.1} parent=11 // pred_region
          _
        $region28: #{tpu_custom_call.1} parent=11 // pred_fallthru
          _
      $region12: #{tpu_custom_call.1} parent=5 // pred_fallthru
        _
      %p204 = scmp.lt.s32.totalorder %s15, 2
      // Predicated region
      $region29: #{tpu_custom_call.1} parent=5 // pred_check
        %p205 = pneg %p204
      $region30: #{tpu_custom_call.1} parent=5 // pred_check_branch
        %207 = sbr.rel (%p205) target = $region32
      $region31: #{tpu_custom_call.1} parent=5 // pred_region
        // Predicated region
        $region33: #{tpu_custom_call.1} parent=31 // pred_check
          %p208 = pneg %p35
        $region34: #{tpu_custom_call.1} parent=31 // pred_check_branch
          %210 = sbr.rel (%p208) target = $region36
        $region35: #{tpu_custom_call.1} parent=31 // pred_region
          %p211 = scmp.lt.s32.totalorder %s15, 1
          %s212 = scalar_select %p211, %s15, 1
          %s213 = smul.addr %s212, 8
          %s214 = scalar_lea.vmem %s0, %s213
        $region36: #{tpu_custom_call.1} parent=31 // pred_fallthru
          _
        // Predicated region
        $region37: #{tpu_custom_call.1} parent=31 // pred_check
          %p215 = pneg %p61
        $region38: #{tpu_custom_call.1} parent=31 // pred_check_branch
          %217 = sbr.rel (%p215) target = $region40
        $region39: #{tpu_custom_call.1} parent=31 // pred_region
          %p218 = scmp.lt.s32.totalorder %s15, 1
          %s219 = scalar_select %p218, %s15, 1
          %s220 = smul.addr %s219, 8
          %s221 = scalar_lea.vmem %s1, %s220
        $region40: #{tpu_custom_call.1} parent=31 // pred_fallthru
          _
      $region32: #{tpu_custom_call.1} parent=5 // pred_fallthru
        _
      %p222 = scmp.le.s32.totalorder 1, %s15
      %p223 = scmp.lt.s32.totalorder %s15, 3
      %p224 = pnand %p222, %p223
      %p225 = pneg %p224
      // Predicated region
      $region41: #{tpu_custom_call.1} parent=5 // pred_check
        _
      $region42: #{tpu_custom_call.1} parent=5 // pred_check_branch
        %227 = sbr.rel (%p224) target = $region44
      $region43: #{tpu_custom_call.1} parent=5 // pred_region
        %s228 = ssub.s32 %s15, 1
        %p229 = scmp.lt.s32.totalorder %s20, 1
        %s230 = scalar_select %p229, %s20, 1
        %s231 = smul.addr %s230, 8
        %s232 = scalar_lea.vmem %s0, %s231
        %p233 = pneg %p41
        %p234 = pneg %p38
        %p235 = scmp.lt.s32.totalorder %s20, 1
        %s236 = scalar_select %p235, %s20, 1
        %s237 = smul.addr %s236, 8
        %s238 = scalar_lea.vmem %s1, %s237
        %p239 = pneg %p67
        %p240 = pneg %p64
        %p241 = pneg %p88
        %p242 = pneg %p85
        %p243 = pneg %p109
        %p244 = pneg %p106
        %p245 = pneg %p130
        %p246 = pneg %p127
        %p247 = pneg %p151
        %p248 = pneg %p148
        %p249 = pneg %p177
        %p250 = pneg %p174
        %s251 = sand.u32 %s164, 1
        %s252 = scalar_lea.sflag [#allocation3], %s251
        %s253 = sand.u32 %s164, 1
        %s254 = smul.addr %s253, 8
        %s255 = scalar_lea.vmem [#allocation2], %s254
        %p256 = scmp.lt.s32.totalorder %s20, 1
        %s257 = scalar_select %p256, %s20, 1
        %s258 = smul.addr %s257, 8
        %s259 = scalar_lea.vmem %s0, %s258
        %p260 = scmp.lt.s32.totalorder %s20, 1
        %s261 = scalar_select %p260, %s20, 1
        %s262 = smul.addr %s261, 8
        %s263 = scalar_lea.vmem %s1, %s262
        %v264 = vld [vmem:[%s263] sm:$0xff]
        %v265 = vld [vmem:[%s259] sm:$0xff]
        %v266 = vld [vmem:[%s2] sm:$0xff]
        %v267 = vld [vmem:[%s2 + $0x8] sm:$0xff]
        %vm268 = vcmask 130048
        %v270 = vsel %vm268, %v265, 0
        %272 = vmatprep.subr.mxu0 0.0
        %273 = vmatpush1.msra.mxu0 %v266
        %274 = vmatprep.subr.mxu0 0.0
        %275 = vmatpush1.msra.mxu0 %v267
        %276 = vmatprep.subr.mxu0 0.0
        %277 = vmatpush1.msra.mxu0 0.0
        %278 = vmatprep.subr.mxu0 0.0
        %279 = vmatpush1.msra.mxu0 0.0
        %280 = vmatprep.subr.mxu0 0.0
        %281 = vmatpush1.msra.mxu0 0.0
        %282 = vmatprep.subr.mxu0 0.0
        %283 = vmatpush1.msra.mxu0 0.0
        %284 = vmatprep.subr.mxu0 0.0
        %285 = vmatpush1.msra.mxu0 0.0
        %286 = vmatprep.subr.mxu0 0.0
        %287 = vmatpush1.msra.mxu0 0.0
        %288 = vmatprep.subr.mxu0 0.0
        %289 = vmatpush1.msra.mxu0 0.0
        %290 = vmatprep.subr.mxu0 0.0
        %291 = vmatpush1.msra.mxu0 0.0
        %292 = vmatprep.subr.mxu0 0.0
        %293 = vmatpush1.msra.mxu0 0.0
        %294 = vmatprep.subr.mxu0 0.0
        %295 = vmatpush1.msra.mxu0 0.0
        %296 = vmatprep.subr.mxu0 0.0
        %297 = vmatpush1.msra.mxu0 0.0
        %298 = vmatprep.subr.mxu0 0.0
        %299 = vmatpush1.msra.mxu0 0.0
        %300 = vmatprep.subr.mxu0 0.0
        %301 = vmatpush1.msra.mxu0 0.0
        %302 = vmatprep.subr.mxu0 0.0
        %303 = vmatpush1.msra.mxu0 0.0
        %304 = vmatprep.subr.mxu0 0.0
        %305 = vmatpush1.msra.mxu0 0.0
        %306 = vmatprep.subr.mxu0 0.0
        %307 = vmatpush1.msra.mxu0 0.0
        %308 = vmatprep.subr.mxu0 0.0
        %309 = vmatpush1.msra.mxu0 0.0
        %310 = vmatprep.subr.mxu0 0.0
        %311 = vmatpush1.msra.mxu0 0.0
        %312 = vmatprep.subr.mxu0 0.0
        %313 = vmatpush1.msra.mxu0 0.0
        %314 = vmatprep.subr.mxu0 0.0
        %315 = vmatpush1.msra.mxu0 0.0
        %316 = vmatprep.subr.mxu0 0.0
        %317 = vmatpush1.msra.mxu0 0.0
        %318 = vmatprep.subr.mxu0 0.0
        %319 = vmatpush1.msra.mxu0 0.0
        %320 = vmatprep.subr.mxu0 0.0
        %321 = vmatpush1.msra.mxu0 0.0
        %322 = vmatprep.subr.mxu0 0.0
        %323 = vmatpush1.msra.mxu0 0.0
        %324 = vmatprep.subr.mxu0 0.0
        %325 = vmatpush1.msra.mxu0 0.0
        %326 = vmatprep.subr.mxu0 0.0
        %327 = vmatpush1.msra.mxu0 0.0
        %328 = vmatprep.subr.mxu0 0.0
        %329 = vmatpush1.msra.mxu0 0.0
        %330 = vmatprep.subr.mxu0 0.0
        %331 = vmatpush1.msra.mxu0 0.0
        %332 = vmatprep.subr.mxu0 0.0
        %333 = vmatpush1.msra.mxu0 0.0
        %334 = vmatprep.subr.mxu0 0.0
        %335 = vmatpush1.msra.mxu0 0.0
        %336 = vmatprep.mubr.f32.mxu0 0.0
        %337 = vmatmul.mubr.f32.gmra.mrb[0].mxu0 %v270
        %v338 = vpop.f32.mrb[0].mxu0
        %v339 = vadd.f32 0.0, %v338
        %v340 = vpop.f32.mrb[0].mxu0
        %341 = vdwg.mxu0
        %v342 = vld [vmem:[%s3] sm:$0x1]
        %v344 = vlaneseq
        %v345 = vshrl.u32 %v344, 7
        %v346 = vsub.s32 0, %v345
        %v347 = vrot.slane %v342, %v346
        %vm349 = vcmask 64512
        %v351 = vsel %vm349, %v264, 0
        %353 = vmatprep.subr.mxu0 0.0
        %354 = vmatpush1.msra.mxu0 %v339
        %355 = vmatprep.subr.mxu0 0.0
        %356 = vmatpush1.msra.mxu0 0.0
        %357 = vmatprep.subr.mxu0 0.0
        %358 = vmatpush1.msra.mxu0 0.0
        %359 = vmatprep.subr.mxu0 0.0
        %360 = vmatpush1.msra.mxu0 0.0
        %361 = vmatprep.subr.mxu0 0.0
        %362 = vmatpush1.msra.mxu0 0.0
        %363 = vmatprep.subr.mxu0 0.0
        %364 = vmatpush1.msra.mxu0 0.0
        %365 = vmatprep.subr.mxu0 0.0
        %366 = vmatpush1.msra.mxu0 0.0
        %367 = vmatprep.subr.mxu0 0.0
        %368 = vmatpush1.msra.mxu0 0.0
        %369 = vmatprep.subr.mxu0 0.0
        %370 = vmatpush1.msra.mxu0 0.0
        %371 = vmatprep.subr.mxu0 0.0
        %372 = vmatpush1.msra.mxu0 0.0
        %373 = vmatprep.subr.mxu0 0.0
        %374 = vmatpush1.msra.mxu0 0.0
        %375 = vmatprep.subr.mxu0 0.0
        %376 = vmatpush1.msra.mxu0 0.0
        %377 = vmatprep.subr.mxu0 0.0
        %378 = vmatpush1.msra.mxu0 0.0
        %379 = vmatprep.subr.mxu0 0.0
        %380 = vmatpush1.msra.mxu0 0.0
        %381 = vmatprep.subr.mxu0 0.0
        %382 = vmatpush1.msra.mxu0 0.0
        %383 = vmatprep.subr.mxu0 0.0
        %384 = vmatpush1.msra.mxu0 0.0
        %385 = vmatprep.subr.mxu0 0.0
        %386 = vmatpush1.msra.mxu0 0.0
        %387 = vmatprep.subr.mxu0 0.0
        %388 = vmatpush1.msra.mxu0 0.0
        %389 = vmatprep.subr.mxu0 0.0
        %390 = vmatpush1.msra.mxu0 0.0
        %391 = vmatprep.subr.mxu0 0.0
        %392 = vmatpush1.msra.mxu0 0.0
        %393 = vmatprep.subr.mxu0 0.0
        %394 = vmatpush1.msra.mxu0 0.0
        %395 = vmatprep.subr.mxu0 0.0
        %396 = vmatpush1.msra.mxu0 0.0
        %397 = vmatprep.subr.mxu0 0.0
        %398 = vmatpush1.msra.mxu0 0.0
        %399 = vmatprep.subr.mxu0 0.0
        %400 = vmatpush1.msra.mxu0 0.0
        %401 = vmatprep.subr.mxu0 0.0
        %402 = vmatpush1.msra.mxu0 0.0
        %403 = vmatprep.subr.mxu0 0.0
        %404 = vmatpush1.msra.mxu0 0.0
        %405 = vmatprep.subr.mxu0 0.0
        %406 = vmatpush1.msra.mxu0 0.0
        %407 = vmatprep.subr.mxu0 0.0
        %408 = vmatpush1.msra.mxu0 0.0
        %409 = vmatprep.subr.mxu0 0.0
        %410 = vmatpush1.msra.mxu0 0.0
        %411 = vmatprep.subr.mxu0 0.0
        %412 = vmatpush1.msra.mxu0 0.0
        %413 = vmatprep.subr.mxu0 0.0
        %414 = vmatpush1.msra.mxu0 0.0
        %415 = vmatprep.subr.mxu0 0.0
        %416 = vmatpush1.msra.mxu0 0.0
        %417 = vmatprep.mubr.f32.mxu0 0.0
        %418 = vmatmul.mubr.f32.gmra.mrb[0].mxu0 %v351
        %v419 = vpop.f32.mrb[0].mxu0
        %v420 = vadd.f32 %v347, %v419
        %v421 = vpop.f32.mrb[0].mxu0
        %422 = vdwg.mxu0
        %v423 = vmax.f32 %v420, 0.0
        %v424 = vld [vmem:[%s4] sm:$0xff]
        %v425 = vld [vmem:[%s4 + $0x8] sm:$0xff]
        %v426 = vld [vmem:[%s4 + $0x10] sm:$0xff]
        %v427 = vld [vmem:[%s4 + $0x18] sm:$0xff]
        %vm428 = vcmask 261120
        %v430 = vsel %vm428, %v423, 0
        %432 = vmatprep.subr.mxu0 0.0
        %433 = vmatpush1.msra.mxu0 %v424
        %434 = vmatprep.subr.mxu0 0.0
        %435 = vmatpush1.msra.mxu0 %v425
        %436 = vmatprep.subr.mxu0 0.0
        %437 = vmatpush1.msra.mxu0 %v426
        %438 = vmatprep.subr.mxu0 0.0
        %439 = vmatpush1.msra.mxu0 %v427
        %440 = vmatprep.subr.mxu0 0.0
        %441 = vmatpush1.msra.mxu0 0.0
        %442 = vmatprep.subr.mxu0 0.0
        %443 = vmatpush1.msra.mxu0 0.0
        %444 = vmatprep.subr.mxu0 0.0
        %445 = vmatpush1.msra.mxu0 0.0
        %446 = vmatprep.subr.mxu0 0.0
        %447 = vmatpush1.msra.mxu0 0.0
        %448 = vmatprep.subr.mxu0 0.0
        %449 = vmatpush1.msra.mxu0 0.0
        %450 = vmatprep.subr.mxu0 0.0
        %451 = vmatpush1.msra.mxu0 0.0
        %452 = vmatprep.subr.mxu0 0.0
        %453 = vmatpush1.msra.mxu0 0.0
        %454 = vmatprep.subr.mxu0 0.0
        %455 = vmatpush1.msra.mxu0 0.0
        %456 = vmatprep.subr.mxu0 0.0
        %457 = vmatpush1.msra.mxu0 0.0
        %458 = vmatprep.subr.mxu0 0.0
        %459 = vmatpush1.msra.mxu0 0.0
        %460 = vmatprep.subr.mxu0 0.0
        %461 = vmatpush1.msra.mxu0 0.0
        %462 = vmatprep.subr.mxu0 0.0
        %463 = vmatpush1.msra.mxu0 0.0
        %464 = vmatprep.subr.mxu0 0.0
        %465 = vmatpush1.msra.mxu0 0.0
        %466 = vmatprep.subr.mxu0 0.0
        %467 = vmatpush1.msra.mxu0 0.0
        %468 = vmatprep.subr.mxu0 0.0
        %469 = vmatpush1.msra.mxu0 0.0
        %470 = vmatprep.subr.mxu0 0.0
        %471 = vmatpush1.msra.mxu0 0.0
        %472 = vmatprep.subr.mxu0 0.0
        %473 = vmatpush1.msra.mxu0 0.0
        %474 = vmatprep.subr.mxu0 0.0
        %475 = vmatpush1.msra.mxu0 0.0
        %476 = vmatprep.subr.mxu0 0.0
        %477 = vmatpush1.msra.mxu0 0.0
        %478 = vmatprep.subr.mxu0 0.0
        %479 = vmatpush1.msra.mxu0 0.0
        %480 = vmatprep.subr.mxu0 0.0
        %481 = vmatpush1.msra.mxu0 0.0
        %482 = vmatprep.subr.mxu0 0.0
        %483 = vmatpush1.msra.mxu0 0.0
        %484 = vmatprep.subr.mxu0 0.0
        %485 = vmatpush1.msra.mxu0 0.0
        %486 = vmatprep.subr.mxu0 0.0
        %487 = vmatpush1.msra.mxu0 0.0
        %488 = vmatprep.subr.mxu0 0.0
        %489 = vmatpush1.msra.mxu0 0.0
        %490 = vmatprep.subr.mxu0 0.0
        %491 = vmatpush1.msra.mxu0 0.0
        %492 = vmatprep.subr.mxu0 0.0
        %493 = vmatpush1.msra.mxu0 0.0
        %494 = vmatprep.subr.mxu0 0.0
        %495 = vmatpush1.msra.mxu0 0.0
        %496 = vmatprep.mubr.f32.mxu0 0.0
        %497 = vmatmul.mubr.f32.gmra.mrb[0].mxu0 %v430
        %v498 = vpop.f32.mrb[0].mxu0
        %v499 = vadd.f32 0.0, %v498
        %v500 = vpop.f32.mrb[0].mxu0
        %501 = vdwg.mxu0
        %v502 = vld [vmem:[%s5] sm:$0x1]
        %v504 = vlaneseq
        %v505 = vshrl.u32 %v504, 7
        %v506 = vsub.s32 0, %v505
        %v507 = vrot.slane %v502, %v506
        %509 = vmatprep.subr.mxu0 0.0
        %510 = vmatpush1.msra.mxu0 %v499
        %511 = vmatprep.subr.mxu0 0.0
        %512 = vmatpush1.msra.mxu0 0.0
        %513 = vmatprep.subr.mxu0 0.0
        %514 = vmatpush1.msra.mxu0 0.0
        %515 = vmatprep.subr.mxu0 0.0
        %516 = vmatpush1.msra.mxu0 0.0
        %517 = vmatprep.subr.mxu0 0.0
        %518 = vmatpush1.msra.mxu0 0.0
        %519 = vmatprep.subr.mxu0 0.0
        %520 = vmatpush1.msra.mxu0 0.0
        %521 = vmatprep.subr.mxu0 0.0
        %522 = vmatpush1.msra.mxu0 0.0
        %523 = vmatprep.subr.mxu0 0.0
        %524 = vmatpush1.msra.mxu0 0.0
        %525 = vmatprep.subr.mxu0 0.0
        %526 = vmatpush1.msra.mxu0 0.0
        %527 = vmatprep.subr.mxu0 0.0
        %528 = vmatpush1.msra.mxu0 0.0
        %529 = vmatprep.subr.mxu0 0.0
        %530 = vmatpush1.msra.mxu0 0.0
        %531 = vmatprep.subr.mxu0 0.0
        %532 = vmatpush1.msra.mxu0 0.0
        %533 = vmatprep.subr.mxu0 0.0
        %534 = vmatpush1.msra.mxu0 0.0
        %535 = vmatprep.subr.mxu0 0.0
        %536 = vmatpush1.msra.mxu0 0.0
        %537 = vmatprep.subr.mxu0 0.0
        %538 = vmatpush1.msra.mxu0 0.0
        %539 = vmatprep.subr.mxu0 0.0
        %540 = vmatpush1.msra.mxu0 0.0
        %541 = vmatprep.subr.mxu0 0.0
        %542 = vmatpush1.msra.mxu0 0.0
        %543 = vmatprep.subr.mxu0 0.0
        %544 = vmatpush1.msra.mxu0 0.0
        %545 = vmatprep.subr.mxu0 0.0
        %546 = vmatpush1.msra.mxu0 0.0
        %547 = vmatprep.subr.mxu0 0.0
        %548 = vmatpush1.msra.mxu0 0.0
        %549 = vmatprep.subr.mxu0 0.0
        %550 = vmatpush1.msra.mxu0 0.0
        %551 = vmatprep.subr.mxu0 0.0
        %552 = vmatpush1.msra.mxu0 0.0
        %553 = vmatprep.subr.mxu0 0.0
        %554 = vmatpush1.msra.mxu0 0.0
        %555 = vmatprep.subr.mxu0 0.0
        %556 = vmatpush1.msra.mxu0 0.0
        %557 = vmatprep.subr.mxu0 0.0
        %558 = vmatpush1.msra.mxu0 0.0
        %559 = vmatprep.subr.mxu0 0.0
        %560 = vmatpush1.msra.mxu0 0.0
        %561 = vmatprep.subr.mxu0 0.0
        %562 = vmatpush1.msra.mxu0 0.0
        %563 = vmatprep.subr.mxu0 0.0
        %564 = vmatpush1.msra.mxu0 0.0
        %565 = vmatprep.subr.mxu0 0.0
        %566 = vmatpush1.msra.mxu0 0.0
        %567 = vmatprep.subr.mxu0 0.0
        %568 = vmatpush1.msra.mxu0 0.0
        %569 = vmatprep.subr.mxu0 0.0
        %570 = vmatpush1.msra.mxu0 0.0
        %571 = vmatprep.subr.mxu0 0.0
        %572 = vmatpush1.msra.mxu0 0.0
        %573 = vmatprep.mubr.f32.mxu0 0.0
        %574 = vmatmul.mubr.f32.gmra.mrb[0].mxu0 %v351
        %v575 = vpop.f32.mrb[0].mxu0
        %v576 = vadd.f32 %v507, %v575
        %v577 = vpop.f32.mrb[0].mxu0
        %578 = vdwg.mxu0
        %579 = vst.msk [vmem:[%s255] sm:$0xff] %vm268, %v576
        %s580 = sand.u32 %s164, 1
        %s581 = scalar_lea.sflag [#allocation3], %s580
        %s582 = sand.u32 %s164, 1
        %s583 = smul.addr %s582, 8
        %s584 = scalar_lea.vmem [#allocation2], %s583
        // Predicated region
        $region45: #{tpu_custom_call.1} parent=43 // pred_check
          %p585 = pneg %p174
        $region46: #{tpu_custom_call.1} parent=43 // pred_check_branch
          %587 = sbr.rel (%p585) target = $region48
        $region47: #{tpu_custom_call.1} parent=43 // pred_region
          %s589 = ssub.s32 128, 128
          %590 = vsyncadd %s581, %s589
          %s591 = smul.addr %s20, 128
          %s592 = scalar_lea.hbm %s6, %s591
          %s594 = sshll.u32 %s584, 4
          %s595 = int_to_ptr.vmem [resolvable:$true] %s594
          %597 = dma.vmem_to_hbm [thread:$0]  %s595, 128, %s592, %s581
        $region48: #{tpu_custom_call.1} parent=43 // pred_fallthru
          _
      $region44: #{tpu_custom_call.1} parent=5 // pred_fallthru
        _
      %p598 = scmp.le.s32.totalorder 2, %s15
      // Predicated region
      $region49: #{tpu_custom_call.1} parent=5 // pred_check
        %p599 = pneg %p598
      $region50: #{tpu_custom_call.1} parent=5 // pred_check_branch
        %601 = sbr.rel (%p599) target = $region52
      $region51: #{tpu_custom_call.1} parent=5 // pred_region
        %s602 = ssub.s32 %s15, 2
        // Predicated region
        $region53: #{tpu_custom_call.1} parent=51 // pred_check
          %p603 = pneg %p180
        $region54: #{tpu_custom_call.1} parent=51 // pred_check_branch
          %605 = sbr.rel (%p603) target = $region56
        $region55: #{tpu_custom_call.1} parent=51 // pred_region
          %s606 = sand.u32 %s165, 1
          %s607 = scalar_lea.sflag [#allocation3], %s606
          %s608 = sand.u32 %s165, 1
          %s609 = smul.addr %s608, 8
          %s610 = scalar_lea.vmem [#allocation2], %s609
          %611 = dma.done %s607, 128
        $region56: #{tpu_custom_call.1} parent=51 // pred_fallthru
          _
      $region52: #{tpu_custom_call.1} parent=5 // pred_fallthru
        _
    $region6: #{tpu_custom_call.1} parent=1 // loop_footer
      %s19 = sadd.s32 1, %s15
    $region7: #{tpu_custom_call.1} parent=1 // loop_footer_branch
      %14 = sbr.rel target = $region3
    $region8: #{tpu_custom_call.1} parent=1 // loop_exit
      _
    %612 = vsyncpa [#allocation3], 1
    %s613 = scalar_lea.sflag [#allocation3], 1
    %614 = vsyncpa %s613, 1

</llo_original>
